<compile_context>
chip_gen: v7x
topology: tpu7x:2x2x1
jax: 0.10.0
libtpu: 0.0.40
codegen_flags: <defaults>
</compile_context>

<pallas_src>
import functools

import jax
import jax.numpy as jnp
from jax.experimental import pallas as pl
from jax.experimental.pallas import tpu as pltpu

SMOOTH = 1e-5


def _elbo_partials_kernel(logp_ref, tgt_ref, out_ref, acc_ref, *, hw, mask_tail):
    """Accumulates per-class partial sums needed for NLL + Dice.

    Block shapes (per grid step (n, t)):
      logp_ref : (C, R, L)     log-probabilities (upcast to f32 here)
      tgt_ref  : (R, L)        int32 labels
      out_ref  : (4, C, L)     [sum logp*1hot, sum p*1hot, sum p*p, sum 1hot]
      acc_ref  : (4, C, AR, L) VMEM accumulator, AR <= 8 sublane rows
    """
    t = pl.program_id(1)

    @pl.when(t == 0)
    def _():
        acc_ref[...] = jnp.zeros_like(acc_ref)

    logp = logp_ref[...].astype(jnp.float32)            # (C, R, L)
    tgt = tgt_ref[...]                                   # (R, L) int32
    C, R, L = logp.shape
    acc_rows = acc_ref.shape[2]
    groups = R // acc_rows

    # Boolean one-hot mask: class index == label (no one-hot multiplies).
    cls = jax.lax.broadcasted_iota(jnp.int32, (C, R, L), 0)
    match = cls == tgt[None, :, :]
    p = jnp.exp(logp)                                    # EUP slot (free-ish)

    if mask_tail:
        # Out-of-range pixels of the last block hold unspecified data; select
        # them to 0 so garbage / inf never reaches a sum.
        row = jax.lax.broadcasted_iota(jnp.int32, (R, L), 0)
        col = jax.lax.broadcasted_iota(jnp.int32, (R, L), 1)
        pix = t * (R * L) + row * L + col
        valid = (pix < hw)[None, :, :]
        m = jnp.logical_and(match, valid)
        z_part = jnp.where(valid, p * p, 0.0)
    else:
        m = match
        z_part = p * p

    nll_part = jnp.where(m, logp, 0.0)                   # logp at target class
    int_part = jnp.where(m, p, 0.0)                      # dice intersection
    y_part = m.astype(jnp.float32)                       # one-hot count

    def fold(a):
        # (C, R, L) -> (C, acc_rows, L): the sublane-group split is a
        # layout-preserving view; the reduction is plain vreg-wise VALU adds
        # (no XLU traffic in the hot loop).
        return a.reshape(C, groups, acc_rows, L).sum(axis=1)

    acc_ref[0] += fold(nll_part)
    acc_ref[1] += fold(int_part)
    acc_ref[2] += fold(z_part)
    acc_ref[3] += fold(y_part)

    @pl.when(t == pl.num_programs(1) - 1)
    def _():
        # One cheap sublane reduction per batch element, lane-dense store.
        out_ref[...] = jnp.sum(acc_ref[...], axis=2)


def elbo_pallas(log_probs, target, kl, beta, *, train_size, num_classes,
                tile_pixels=32768):
    N, C, H, W = log_probs.shape
    assert C == num_classes
    HW = H * W

    # Conservative VMEM budget for the double-buffered input blocks: stay well
    # under the smallest default scoped VMEM (v5e: 16 MiB) so no flag tweaking
    # is needed on any generation.
    itemsize = jnp.dtype(log_probs.dtype).itemsize
    per_pixel = 2 * (C * itemsize + 4)              # 2 buffers * (logp + int32 label)
    max_tile = max(1024, ((12 * 1024 * 1024) // per_pixel) // 1024 * 1024)
    tile_pixels = max(1024, min((tile_pixels // 1024) * 1024, max_tile))

    if HW % 128 == 0:
        # Packed layout: pixels fill sublanes AND lanes -> dense vregs even for
        # small C.  All reshapes below are free (no HBM data movement).
        G = HW // 128
        L = 128
        desired_rows = max(8, ((tile_pixels // 128) // 8) * 8)
        R = G if G <= desired_rows else desired_rows
        T = pl.cdiv(G, R)
        x = log_probs.reshape(N, C, G, L)
        tg = target.reshape(N, 1, G, L)
        index_map = lambda n, t: (n, 0, t, 0)
        covered = T * R * L
    else:
        # Fallback: lane-only tiling of the flattened pixel axis.
        lane_tile = max(128, (tile_pixels // 128) * 128)
        L = HW if HW <= lane_tile else lane_tile
        R = 1
        T = pl.cdiv(HW, L)
        x = log_probs.reshape(N, C, 1, HW)
        tg = target.reshape(N, 1, 1, HW)
        index_map = lambda n, t: (n, 0, 0, t)
        covered = T * L

    if tg.dtype != jnp.int32:
        tg = tg.astype(jnp.int32)

    mask_tail = covered != HW
    acc_rows = 8 if (R % 8 == 0) else R

    kernel = functools.partial(_elbo_partials_kernel, hw=HW, mask_tail=mask_tail)

    partials = pl.pallas_call(
        kernel,
        out_shape=jax.ShapeDtypeStruct((N, 4, C, L), jnp.float32),
        grid_spec=pltpu.PrefetchScalarGridSpec(
            num_scalar_prefetch=0,
            grid=(N, T),
            in_specs=[
                pl.BlockSpec((None, C, R, L), index_map),      # log-probs
                pl.BlockSpec((None, None, R, L), index_map),   # labels
            ],
            out_specs=pl.BlockSpec((None, 4, C, L), lambda n, t: (n, 0, 0, 0)),
            scratch_shapes=[pltpu.VMEM((4, C, acc_rows, L), jnp.float32)],
        ),
        compiler_params=pltpu.CompilerParams(
            dimension_semantics=("parallel", "arbitrary")),
    )(x, tg)

    # Tiny JAX epilogue: fold lane-parallel / per-batch partials to scalars.
    s = jnp.sum(partials, axis=(0, 3))                         # (4, C)
    total_pixels = float(N * HW)
    nll = -jnp.sum(s[0]) / total_pixels
    dice_per_class = 1.0 - (2.0 * s[1] + SMOOTH) / (s[2] + s[3] + SMOOTH)
    dice = jnp.sum(dice_per_class) / num_classes
    return (nll + dice) * train_size + beta * kl


def elbo_reference(log_probs, target, kl, beta, train_size, num_classes):
    """Pure-JAX reference mirroring the PyTorch forward."""
    N, C, H, W = log_probs.shape
    onehot = jax.nn.one_hot(target, C, axis=1, dtype=jnp.float32)  # (N,C,H,W)
    nll = -jnp.mean(jnp.sum(log_probs * onehot, axis=1))
    probs = jnp.exp(log_probs)
    dice = 0.0
    for i in range(C):
        score = probs[:, i]
        t = onehot[:, i]
        inter = jnp.sum(score * t)
        y = jnp.sum(t * t)
        z = jnp.sum(score * score)
        dice = dice + (1.0 - (2.0 * inter + SMOOTH) / (z + y + SMOOTH))
    dice = dice / C
    return (nll + dice) * train_size + beta * kl


if __name__ == "__main__":
    key = jax.random.PRNGKey(0)
    k1, k2, k3 = jax.random.split(key, 3)

    N, C, H, W = 2, 4, 16, 16
    train_size = 100
    beta = 0.1

    logits = jax.random.normal(k1, (N, C, H, W), jnp.float32)
    log_probs = jax.nn.log_softmax(logits, axis=1)          # "input" (log-probs)
    target = jax.random.randint(k2, (N, H, W), 0, C, jnp.int32)
    kl = jnp.abs(jax.random.normal(k3, (), jnp.float32)) * 10.0

    out = elbo_pallas(log_probs, target, kl, beta,
                      train_size=train_size, num_classes=C)
    out = jax.block_until_ready(out)

    ref = elbo_reference(log_probs, target, kl, beta, train_size, C)
    assert jnp.allclose(out, ref, rtol=1e-4, atol=1e-4), (out, ref)

    print("KERNEL_OK")
</pallas_src>

<mosaic_0001>
module attributes {stable_mosaic.version = 11 : i64} {
  func.func @_elbo_partials_kernel(%arg0: i32, %arg1: i32, %arg2: memref<1x4x2x128xf32, #tpu.memory_space<vmem>>, %arg3: memref<1x1x2x128xi32, #tpu.memory_space<vmem>>, %arg4: memref<1x4x4x128xf32, #tpu.memory_space<vmem>>, %arg5: memref<4x4x2x128xf32, #tpu.memory_space<vmem>>) attributes {dimension_semantics = [#tpu.dimension_semantics<parallel>, #tpu.dimension_semantics<arbitrary>], iteration_bounds = array<i64: 2, 1>, scalar_prefetch = 0 : i64, scratch_operands = 1 : i64, tpu.core_type = #tpu.core_type<tc>, window_params = [{transform_indices = @transform_0, window_bounds = array<i64: 1, 4, 2, 128>}, {transform_indices = @transform_1, window_bounds = array<i64: 1, 1, 2, 128>}, {transform_indices = @transform_2, window_bounds = array<i64: 1, 4, 4, 128>}]} {
    %c0_i32 = arith.constant 0 : i32
    %0 = arith.cmpi eq, %arg1, %c0_i32 : i32
    %1 = arith.extui %0 : i1 to i32
    %c0_i32_0 = arith.constant 0 : i32
    %2 = arith.cmpi ne, %1, %c0_i32_0 : i32
    scf.if %2 {
      %cst_44 = arith.constant 0.000000e+00 : f32
      %54 = vector.broadcast %cst_44 : f32 to vector<4x4x2x128xf32>
      %c0_45 = arith.constant 0 : index
      %c0_46 = arith.constant 0 : index
      %c0_47 = arith.constant 0 : index
      %c0_48 = arith.constant 0 : index
      %55 = vector.load %arg5[%c0_45, %c0_46, %c0_47, %c0_48] : memref<4x4x2x128xf32, #tpu.memory_space<vmem>>, vector<4x4x2x128xf32>
      tpu.vector_store %arg5[%c0_45, %c0_46, %c0_47, %c0_48], %54 {strides = array<i32>} : memref<4x4x2x128xf32, #tpu.memory_space<vmem>>, vector<4x4x2x128xf32>,
    } else {
    }
    %c0 = arith.constant 0 : index
    %c0_1 = arith.constant 0 : index
    %c0_2 = arith.constant 0 : index
    %c0_3 = arith.constant 0 : index
    %3 = vector.load %arg2[%c0, %c0_1, %c0_2, %c0_3] : memref<1x4x2x128xf32, #tpu.memory_space<vmem>>, vector<1x4x2x128xf32>
    %4 = vector.shape_cast %3 : vector<1x4x2x128xf32> to vector<4x2x128xf32>
    %c0_4 = arith.constant 0 : index
    %c0_5 = arith.constant 0 : index
    %c0_6 = arith.constant 0 : index
    %c0_7 = arith.constant 0 : index
    %5 = vector.load %arg3[%c0_4, %c0_5, %c0_6, %c0_7] : memref<1x1x2x128xi32, #tpu.memory_space<vmem>>, vector<1x1x2x128xi32>
    %6 = vector.shape_cast %5 : vector<1x1x2x128xi32> to vector<2x128xi32>
    %7 = tpu.iota {dimensions = array<i32: 0>} : vector<4x2x128xi32>
    %8 = vector.shape_cast %6 : vector<2x128xi32> to vector<1x2x128xi32>
    %9 = vector.broadcast %8 : vector<1x2x128xi32> to vector<4x2x128xi32>
    %10 = arith.cmpi eq, %7, %9 : vector<4x2x128xi32>
    %11 = math.exp %4 : vector<4x2x128xf32>
    %12 = arith.mulf %11, %11 : vector<4x2x128xf32>
    %cst = arith.constant 0.000000e+00 : f32
    %13 = vector.broadcast %cst : f32 to vector<4x2x128xf32>
    %14 = arith.select %10, %4, %13 : vector<4x2x128xi1>, vector<4x2x128xf32>
    %cst_8 = arith.constant 0.000000e+00 : f32
    %15 = vector.broadcast %cst_8 : f32 to vector<4x2x128xf32>
    %16 = arith.select %10, %11, %15 : vector<4x2x128xi1>, vector<4x2x128xf32>
    %17 = arith.extui %10 : vector<4x2x128xi1> to vector<4x2x128xi32>
    %18 = arith.sitofp %17 : vector<4x2x128xi32> to vector<4x2x128xf32>
    %c0_9 = arith.constant 0 : index
    %c0_10 = arith.constant 0 : index
    %c0_11 = arith.constant 0 : index
    %c0_12 = arith.constant 0 : index
    %19 = vector.load %arg5[%c0_9, %c0_10, %c0_11, %c0_12] : memref<4x4x2x128xf32, #tpu.memory_space<vmem>>, vector<1x4x2x128xf32>
    %20 = vector.shape_cast %19 : vector<1x4x2x128xf32> to vector<4x2x128xf32>
    %21 = vector.shape_cast %14 : vector<4x2x128xf32> to vector<4x1x2x128xf32>
    %cst_13 = arith.constant dense<0.000000e+00> : vector<4x2x128xf32>
    %22 = vector.multi_reduction <add>, %21, %cst_13 [1] : vector<4x1x2x128xf32> to vector<4x2x128xf32>
    %23 = arith.addf %20, %22 : vector<4x2x128xf32>
    %c0_14 = arith.constant 0 : index
    %c0_15 = arith.constant 0 : index
    %c0_16 = arith.constant 0 : index
    %c0_17 = arith.constant 0 : index
    %24 = vector.load %arg5[%c0_14, %c0_15, %c0_16, %c0_17] : memref<4x4x2x128xf32, #tpu.memory_space<vmem>>, vector<1x4x2x128xf32>
    %25 = vector.shape_cast %24 : vector<1x4x2x128xf32> to vector<4x2x128xf32>
    %26 = vector.shape_cast %23 : vector<4x2x128xf32> to vector<1x4x2x128xf32>
    tpu.vector_store %arg5[%c0_14, %c0_15, %c0_16, %c0_17], %26 {strides = array<i32>} : memref<4x4x2x128xf32, #tpu.memory_space<vmem>>, vector<1x4x2x128xf32>,
    %c1 = arith.constant 1 : index
    %c0_18 = arith.constant 0 : index
    %c0_19 = arith.constant 0 : index
    %c0_20 = arith.constant 0 : index
    %27 = vector.load %arg5[%c1, %c0_18, %c0_19, %c0_20] : memref<4x4x2x128xf32, #tpu.memory_space<vmem>>, vector<1x4x2x128xf32>
    %28 = vector.shape_cast %27 : vector<1x4x2x128xf32> to vector<4x2x128xf32>
    %29 = vector.shape_cast %16 : vector<4x2x128xf32> to vector<4x1x2x128xf32>
    %cst_21 = arith.constant dense<0.000000e+00> : vector<4x2x128xf32>
    %30 = vector.multi_reduction <add>, %29, %cst_21 [1] : vector<4x1x2x128xf32> to vector<4x2x128xf32>
    %31 = arith.addf %28, %30 : vector<4x2x128xf32>
    %c1_22 = arith.constant 1 : index
    %c0_23 = arith.constant 0 : index
    %c0_24 = arith.constant 0 : index
    %c0_25 = arith.constant 0 : index
    %32 = vector.load %arg5[%c1_22, %c0_23, %c0_24, %c0_25] : memref<4x4x2x128xf32, #tpu.memory_space<vmem>>, vector<1x4x2x128xf32>
    %33 = vector.shape_cast %32 : vector<1x4x2x128xf32> to vector<4x2x128xf32>
    %34 = vector.shape_cast %31 : vector<4x2x128xf32> to vector<1x4x2x128xf32>
    tpu.vector_store %arg5[%c1_22, %c0_23, %c0_24, %c0_25], %34 {strides = array<i32>} : memref<4x4x2x128xf32, #tpu.memory_space<vmem>>, vector<1x4x2x128xf32>,
    %c2 = arith.constant 2 : index
    %c0_26 = arith.constant 0 : index
    %c0_27 = arith.constant 0 : index
    %c0_28 = arith.constant 0 : index
    %35 = vector.load %arg5[%c2, %c0_26, %c0_27, %c0_28] : memref<4x4x2x128xf32, #tpu.memory_space<vmem>>, vector<1x4x2x128xf32>
    %36 = vector.shape_cast %35 : vector<1x4x2x128xf32> to vector<4x2x128xf32>
    %37 = vector.shape_cast %12 : vector<4x2x128xf32> to vector<4x1x2x128xf32>
    %cst_29 = arith.constant dense<0.000000e+00> : vector<4x2x128xf32>
    %38 = vector.multi_reduction <add>, %37, %cst_29 [1] : vector<4x1x2x128xf32> to vector<4x2x128xf32>
    %39 = arith.addf %36, %38 : vector<4x2x128xf32>
    %c2_30 = arith.constant 2 : index
    %c0_31 = arith.constant 0 : index
    %c0_32 = arith.constant 0 : index
    %c0_33 = arith.constant 0 : index
    %40 = vector.load %arg5[%c2_30, %c0_31, %c0_32, %c0_33] : memref<4x4x2x128xf32, #tpu.memory_space<vmem>>, vector<1x4x2x128xf32>
    %41 = vector.shape_cast %40 : vector<1x4x2x128xf32> to vector<4x2x128xf32>
    %42 = vector.shape_cast %39 : vector<4x2x128xf32> to vector<1x4x2x128xf32>
    tpu.vector_store %arg5[%c2_30, %c0_31, %c0_32, %c0_33], %42 {strides = array<i32>} : memref<4x4x2x128xf32, #tpu.memory_space<vmem>>, vector<1x4x2x128xf32>,
    %c3 = arith.constant 3 : index
    %c0_34 = arith.constant 0 : index
    %c0_35 = arith.constant 0 : index
    %c0_36 = arith.constant 0 : index
    %43 = vector.load %arg5[%c3, %c0_34, %c0_35, %c0_36] : memref<4x4x2x128xf32, #tpu.memory_space<vmem>>, vector<1x4x2x128xf32>
    %44 = vector.shape_cast %43 : vector<1x4x2x128xf32> to vector<4x2x128xf32>
    %45 = vector.shape_cast %18 : vector<4x2x128xf32> to vector<4x1x2x128xf32>
    %cst_37 = arith.constant dense<0.000000e+00> : vector<4x2x128xf32>
    %46 = vector.multi_reduction <add>, %45, %cst_37 [1] : vector<4x1x2x128xf32> to vector<4x2x128xf32>
    %47 = arith.addf %44, %46 : vector<4x2x128xf32>
    %c3_38 = arith.constant 3 : index
    %c0_39 = arith.constant 0 : index
    %c0_40 = arith.constant 0 : index
    %c0_41 = arith.constant 0 : index
    %48 = vector.load %arg5[%c3_38, %c0_39, %c0_40, %c0_41] : memref<4x4x2x128xf32, #tpu.memory_space<vmem>>, vector<1x4x2x128xf32>
    %49 = vector.shape_cast %48 : vector<1x4x2x128xf32> to vector<4x2x128xf32>
    %50 = vector.shape_cast %47 : vector<4x2x128xf32> to vector<1x4x2x128xf32>
    tpu.vector_store %arg5[%c3_38, %c0_39, %c0_40, %c0_41], %50 {strides = array<i32>} : memref<4x4x2x128xf32, #tpu.memory_space<vmem>>, vector<1x4x2x128xf32>,
    %c0_i32_42 = arith.constant 0 : i32
    %51 = arith.cmpi eq, %arg1, %c0_i32_42 : i32
    %52 = arith.extui %51 : i1 to i32
    %c0_i32_43 = arith.constant 0 : i32
    %53 = arith.cmpi ne, %52, %c0_i32_43 : i32
    scf.if %53 {
      %c0_44 = arith.constant 0 : index
      %c0_45 = arith.constant 0 : index
      %c0_46 = arith.constant 0 : index
      %c0_47 = arith.constant 0 : index
      %54 = vector.load %arg5[%c0_44, %c0_45, %c0_46, %c0_47] : memref<4x4x2x128xf32, #tpu.memory_space<vmem>>, vector<4x4x2x128xf32>
      %cst_48 = arith.constant dense<0.000000e+00> : vector<4x4x128xf32>
      %55 = vector.multi_reduction <add>, %54, %cst_48 [2] : vector<4x4x2x128xf32> to vector<4x4x128xf32>
      %c0_49 = arith.constant 0 : index
      %c0_50 = arith.constant 0 : index
      %c0_51 = arith.constant 0 : index
      %c0_52 = arith.constant 0 : index
      %56 = vector.load %arg4[%c0_49, %c0_50, %c0_51, %c0_52] : memref<1x4x4x128xf32, #tpu.memory_space<vmem>>, vector<1x4x4x128xf32>
      %57 = vector.shape_cast %56 : vector<1x4x4x128xf32> to vector<4x4x128xf32>
      %58 = vector.shape_cast %55 : vector<4x4x128xf32> to vector<1x4x4x128xf32>
      tpu.vector_store %arg4[%c0_49, %c0_50, %c0_51, %c0_52], %58 {strides = array<i32>} : memref<1x4x4x128xf32, #tpu.memory_space<vmem>>, vector<1x4x4x128xf32>,
    } else {
    }
    return
  }
  func.func @transform_0(%arg0: i32, %arg1: i32) -> (i32, i32, i32, i32) {
    %c0_i32 = arith.constant 0 : i32
    %c0_i32_0 = arith.constant 0 : i32
    %c0_i32_1 = arith.constant 0 : i32
    return %arg0, %c0_i32, %arg1, %c0_i32_0 : i32, i32, i32, i32
  }
  func.func @transform_1(%arg0: i32, %arg1: i32) -> (i32, i32, i32, i32) {
    %c0_i32 = arith.constant 0 : i32
    %c0_i32_0 = arith.constant 0 : i32
    %c0_i32_1 = arith.constant 0 : i32
    return %arg0, %c0_i32, %arg1, %c0_i32_0 : i32, i32, i32, i32
  }
  func.func @transform_2(%arg0: i32, %arg1: i32) -> (i32, i32, i32, i32) {
    %c0_i32 = arith.constant 0 : i32
    %c0_i32_0 = arith.constant 0 : i32
    %c0_i32_1 = arith.constant 0 : i32
    %c0_i32_2 = arith.constant 0 : i32
    return %arg0, %c0_i32, %c0_i32_0, %c0_i32_1 : i32, i32, i32, i32
  }
}

</mosaic_0001>

<llo_original>
// kernel: tpu_custom_call.1
$region0: #{tpu_custom_call.1}
  #allocation0 [shape = 'u32[]', space=smem, size = 0x4, offset = 0x4, fixed_abs, tag = 'smem constant byte address 0x4 - core index']
  #allocation1 [shape = 'u32[144,128]{1,0:T(1,128)}', space=vmem, size = 0x12000, scoped, tag = 'internal scratch']
  #allocation2 [shape = 'f32[4,4,2,128]{3,2,1,0:T(2,128)}', space=vmem, size = 0x4000, scoped, tag = 'scratch operand']
  %s0 = inlined_call_operand.hbm [shape: f32[2,4,2,128], index: 0, kind: input, shape index: {}]
  %s1 = inlined_call_operand.hbm [shape: s32[2,1,2,128], index: 1, kind: input, shape index: {}]
  %s2 = inlined_call_operand.hbm [shape: f32[2,4,4,128], index: 2, kind: output, shape index: {}]
  %s3 = sld [smem:[#allocation0]]
  $region57: #{tpu_custom_call.1} parent=0
    _
  %s5 = ssub.s32 1, %s3
  %s6 = scalar_select 0, %s5, %s3
  $region1: #{tpu_custom_call.1} parent=0
    #allocation3 [shape = 'u8[8192]{0}', space=vmem, size = 0x2000, scoped, tag = 'input window, operand 0']
    #allocation4 [shape = 's32[2]{0}', space=sflag, size = 0x8, scoped, tag = 'scoped memory for tpu_custom_call.1']
    #allocation5 [shape = 's32[2]{0}', space=sflag, size = 0x8, scoped, tag = 'scoped memory for tpu_custom_call.1']
    #allocation6 [shape = 'u8[2048]{0}', space=vmem, size = 0x800, scoped, tag = 'input window, operand 1']
    #allocation7 [shape = 's32[2]{0}', space=sflag, size = 0x8, scoped, tag = 'scoped memory for tpu_custom_call.1']
    #allocation8 [shape = 'u8[16384]{0}', space=vmem, size = 0x4000, scoped, tag = 'output window, operand 0']
    %7 = vsyncpa [#allocation4], 0
    %s8 = scalar_lea.sflag [#allocation4], 1
    %9 = vsyncpa %s8, 0
    %10 = vsyncpa [#allocation7], 0
    %s11 = scalar_lea.sflag [#allocation7], 1
    %12 = vsyncpa %s11, 0
    %13 = vsyncpa [#allocation5], 0
    %s14 = scalar_lea.sflag [#allocation5], 1
    %15 = vsyncpa %s14, 0
    loop: start=0, step=1, limit=4
    $region2: #{tpu_custom_call.1} parent=1 // loop_pre_header
      _
    $region3: #{tpu_custom_call.1} parent=1 // loop_header
      %s17 = sphi 0, %s21
      %p18 = scmp.ge.s32.totalorder %s17, 4
      %s24 = sphi 0, %s36
      %s25 = sphi 0, %s32
      %s26 = sphi 0, %s24
      %s27 = sphi 0, %s25
      %s28 = sphi 0, %s26
      %s29 = sphi 0, %s27
      %s41 = sphi 0, %s43
      %s44 = sphi 0, %s41
      %s45 = sphi 0, %s44
      %s61 = sphi 0, %s45
      %s69 = sphi 0, %s71
      %s72 = sphi 0, %s69
      %s73 = sphi 0, %s72
      %s89 = sphi 0, %s73
      %s95 = sphi 0, %s97
      %s98 = sphi 0, %s95
      %s99 = sphi 0, %s98
      %s115 = sphi 0, %s99
    $region4: #{tpu_custom_call.1} parent=1 // loop_header_branch
      %20 = sbr.rel (%p18) target = $region8
    $region5: #{tpu_custom_call.1} parent=1 // loop_body
      %s22 = ssub.s32 %s17, 1
      %s23 = ssub.s32 %s17, 2
      %s30 = sadd.s32 1, %s25
      %p31 = scmp.ge.s32.totalorder %s30, 1
      %s32 = scalar_select %p31, 0, %s30
      %s33 = sadd.s32 1, %s24
      %s34 = scalar_select %p31, %s33, %s24
      %p35 = scmp.ge.s32.totalorder %s34, 2
      %s36 = scalar_select %p35, 0, %s34
      %s37 = ssub.s32 %s24, %s36
      %s38 = ssub.s32 %s25, %s32
      %s39 = sor.u32 %s37, %s38
      %p40 = scmp.eq.s32.totalorder %s39, 0
      %s42 = sadd.s32 %s41, 1
      %s43 = scalar_select %p40, %s41, %s42
      %p46 = pneg %p40
      %p47 = scmp.eq.s32.totalorder %s17, 1
      %p48 = por %p46, %p47
      %p49 = scmp.ne.s32.totalorder %s41, %s44
      %p50 = scmp.eq.s32.totalorder %s17, 0
      %p51 = por %p49, %p50
      %p52 = scmp.ne.s32.totalorder %s41, %s44
      %p53 = scmp.eq.s32.totalorder %s22, 1
      %p54 = por %p52, %p53
      %p55 = scmp.ne.s32.totalorder %s44, %s45
      %p56 = scmp.eq.s32.totalorder %s22, 0
      %p57 = por %p55, %p56
      %p58 = scmp.ne.s32.totalorder %s44, %s45
      %p59 = scmp.eq.s32.totalorder %s23, 1
      %p60 = por %p58, %p59
      %p62 = scmp.ne.s32.totalorder %s45, %s61
      %p63 = scmp.eq.s32.totalorder %s23, 0
      %p64 = por %p62, %p63
      %s65 = ssub.s32 %s24, %s36
      %s66 = ssub.s32 %s25, %s32
      %s67 = sor.u32 %s65, %s66
      %p68 = scmp.eq.s32.totalorder %s67, 0
      %s70 = sadd.s32 %s69, 1
      %s71 = scalar_select %p68, %s69, %s70
      %p74 = pneg %p68
      %p75 = scmp.eq.s32.totalorder %s17, 1
      %p76 = por %p74, %p75
      %p77 = scmp.ne.s32.totalorder %s69, %s72
      %p78 = scmp.eq.s32.totalorder %s17, 0
      %p79 = por %p77, %p78
      %p80 = scmp.ne.s32.totalorder %s69, %s72
      %p81 = scmp.eq.s32.totalorder %s22, 1
      %p82 = por %p80, %p81
      %p83 = scmp.ne.s32.totalorder %s72, %s73
      %p84 = scmp.eq.s32.totalorder %s22, 0
      %p85 = por %p83, %p84
      %p86 = scmp.ne.s32.totalorder %s72, %s73
      %p87 = scmp.eq.s32.totalorder %s23, 1
      %p88 = por %p86, %p87
      %p90 = scmp.ne.s32.totalorder %s73, %s89
      %p91 = scmp.eq.s32.totalorder %s23, 0
      %p92 = por %p90, %p91
      %s93 = ssub.s32 %s24, %s36
      %p94 = scmp.eq.s32.totalorder %s93, 0
      %s96 = sadd.s32 %s95, 1
      %s97 = scalar_select %p94, %s95, %s96
      %p100 = pneg %p94
      %p101 = scmp.eq.s32.totalorder %s17, 1
      %p102 = por %p100, %p101
      %p103 = scmp.ne.s32.totalorder %s95, %s98
      %p104 = scmp.eq.s32.totalorder %s17, 0
      %p105 = por %p103, %p104
      %p106 = scmp.ne.s32.totalorder %s95, %s98
      %p107 = scmp.eq.s32.totalorder %s22, 1
      %p108 = por %p106, %p107
      %p109 = scmp.ne.s32.totalorder %s98, %s99
      %p110 = scmp.eq.s32.totalorder %s22, 0
      %p111 = por %p109, %p110
      %p112 = scmp.ne.s32.totalorder %s98, %s99
      %p113 = scmp.eq.s32.totalorder %s23, 1
      %p114 = por %p112, %p113
      %p116 = scmp.ne.s32.totalorder %s99, %s115
      %p117 = scmp.eq.s32.totalorder %s23, 0
      %p118 = por %p116, %p117
      %p119 = scmp.le.s32.totalorder 1, %s17
      %p120 = scmp.lt.s32.totalorder %s17, 3
      %p121 = pnand %p119, %p120
      %p122 = pneg %p121
      // Predicated region
      $region9: #{tpu_custom_call.1} parent=5 // pred_check
        _
      $region10: #{tpu_custom_call.1} parent=5 // pred_check_branch
        %124 = sbr.rel (%p121) target = $region12
      $region11: #{tpu_custom_call.1} parent=5 // pred_region
        %s125 = ssub.s32 %s17, 1
      $region12: #{tpu_custom_call.1} parent=5 // pred_fallthru
        _
      %p126 = scmp.lt.s32.totalorder %s17, 2
      // Predicated region
      $region13: #{tpu_custom_call.1} parent=5 // pred_check
        %p127 = pneg %p126
      $region14: #{tpu_custom_call.1} parent=5 // pred_check_branch
        %129 = sbr.rel (%p127) target = $region16
      $region15: #{tpu_custom_call.1} parent=5 // pred_region
        // Predicated region
        $region17: #{tpu_custom_call.1} parent=15 // pred_check
          %p130 = pneg %p51
        $region18: #{tpu_custom_call.1} parent=15 // pred_check_branch
          %132 = sbr.rel (%p130) target = $region20
        $region19: #{tpu_custom_call.1} parent=15 // pred_region
          %s133 = sand.u32 %s41, 1
          %s134 = scalar_lea.sflag [#allocation4], %s133
          %s135 = sand.u32 %s41, 1
          %s136 = smul.addr %s135, 8
          %s137 = scalar_lea.vmem [#allocation3], %s136
          %s139 = ssub.s32 128, 128
          %140 = vsyncadd %s134, %s139
          %s141 = smul.addr %s24, 4
          %s142 = sadd.s32 %s25, %s141
          %s143 = smul.addr %s142, 32
          %s144 = scalar_lea.hbm %s0, %s143
          %s145 = sshll.u32 %s137, 4
          %s146 = int_to_ptr.vmem [resolvable:$true] %s145
          %151 = dma.hbm_to_vmem [thread:$0]  %s144, 128, %s146, %s134, 32, 32, 2
        $region20: #{tpu_custom_call.1} parent=15 // pred_fallthru
          _
        // Predicated region
        $region21: #{tpu_custom_call.1} parent=15 // pred_check
          %p152 = pneg %p79
        $region22: #{tpu_custom_call.1} parent=15 // pred_check_branch
          %154 = sbr.rel (%p152) target = $region24
        $region23: #{tpu_custom_call.1} parent=15 // pred_region
          %s155 = sand.u32 %s69, 1
          %s156 = scalar_lea.sflag [#allocation7], %s155
          %s157 = sand.u32 %s69, 1
          %s158 = smul.addr %s157, 2
          %s159 = scalar_lea.vmem [#allocation6], %s158
          %s161 = ssub.s32 32, 32
          %162 = vsyncadd %s156, %s161
          %s163 = sadd.s32 %s25, %s24
          %s164 = smul.addr %s163, 32
          %s165 = scalar_lea.hbm %s1, %s164
          %s167 = sshll.u32 %s159, 4
          %s168 = int_to_ptr.vmem [resolvable:$true] %s167
          %170 = dma.hbm_to_vmem [thread:$0]  %s165, 32, %s168, %s156
        $region24: #{tpu_custom_call.1} parent=15 // pred_fallthru
          _
      $region16: #{tpu_custom_call.1} parent=5 // pred_fallthru
        _
      %p171 = scmp.le.s32.totalorder 1, %s17
      %p172 = scmp.lt.s32.totalorder %s17, 3
      %p173 = pnand %p171, %p172
      %p174 = pneg %p173
      // Predicated region
      $region25: #{tpu_custom_call.1} parent=5 // pred_check
        _
      $region26: #{tpu_custom_call.1} parent=5 // pred_check_branch
        %176 = sbr.rel (%p173) target = $region28
      $region27: #{tpu_custom_call.1} parent=5 // pred_region
        %s177 = ssub.s32 %s17, 1
        %s178 = sand.u32 %s44, 1
        %s179 = scalar_lea.sflag [#allocation4], %s178
        %s180 = sand.u32 %s44, 1
        %s181 = smul.addr %s180, 8
        %s182 = scalar_lea.vmem [#allocation3], %s181
        // Predicated region
        $region29: #{tpu_custom_call.1} parent=27 // pred_check
          %p183 = pneg %p57
        $region30: #{tpu_custom_call.1} parent=27 // pred_check_branch
          %185 = sbr.rel (%p183) target = $region32
        $region31: #{tpu_custom_call.1} parent=27 // pred_region
          %186 = dma.done %s179, 128
        $region32: #{tpu_custom_call.1} parent=27 // pred_fallthru
          _
        %s187 = sand.u32 %s72, 1
        %s188 = scalar_lea.sflag [#allocation7], %s187
        %s189 = sand.u32 %s72, 1
        %s190 = smul.addr %s189, 2
        %s191 = scalar_lea.vmem [#allocation6], %s190
        // Predicated region
        $region33: #{tpu_custom_call.1} parent=27 // pred_check
          %p192 = pneg %p85
        $region34: #{tpu_custom_call.1} parent=27 // pred_check_branch
          %194 = sbr.rel (%p192) target = $region36
        $region35: #{tpu_custom_call.1} parent=27 // pred_region
          %195 = dma.done %s188, 32
        $region36: #{tpu_custom_call.1} parent=27 // pred_fallthru
          _
        %s196 = sand.u32 %s44, 1
        %s197 = scalar_lea.sflag [#allocation4], %s196
        %s198 = sand.u32 %s44, 1
        %s199 = smul.addr %s198, 8
        %s200 = scalar_lea.vmem [#allocation3], %s199
        %p201 = pneg %p57
        %p202 = pneg %p54
        %s203 = sand.u32 %s72, 1
        %s204 = scalar_lea.sflag [#allocation7], %s203
        %s205 = sand.u32 %s72, 1
        %s206 = smul.addr %s205, 2
        %s207 = scalar_lea.vmem [#allocation6], %s206
        %p208 = pneg %p85
        %p209 = pneg %p82
        %p210 = pneg %p111
        %p211 = pneg %p108
        %s212 = sand.u32 %s98, 1
        %s213 = scalar_lea.sflag [#allocation5], %s212
        %s214 = sand.u32 %s98, 1
        %s215 = smul.addr %s214, 16
        %s216 = scalar_lea.vmem [#allocation8], %s215
        %p217 = scmp.eq.s32.totalorder %s27, 0
        // Predicated region
        $region37: #{tpu_custom_call.1} parent=27 // pred_check
          %p218 = pneg %p217
        $region38: #{tpu_custom_call.1} parent=27 // pred_check_branch
          %220 = sbr.rel (%p218) target = $region40
        $region39: #{tpu_custom_call.1} parent=27 // pred_region
          %221 = vst [vmem:[#allocation2] sm:$0x3] 0.0
          %222 = vst [vmem:[#allocation2 + $0x2] sm:$0x3] 0.0
          %223 = vst [vmem:[#allocation2 + $0x4] sm:$0x3] 0.0
          %224 = vst [vmem:[#allocation2 + $0x6] sm:$0x3] 0.0
          %225 = vst [vmem:[#allocation2 + $0x8] sm:$0x3] 0.0
          %226 = vst [vmem:[#allocation2 + $0xa] sm:$0x3] 0.0
          %227 = vst [vmem:[#allocation2 + $0xc] sm:$0x3] 0.0
          %228 = vst [vmem:[#allocation2 + $0xe] sm:$0x3] 0.0
          %229 = vst [vmem:[#allocation2 + $0x10] sm:$0x3] 0.0
          %230 = vst [vmem:[#allocation2 + $0x12] sm:$0x3] 0.0
          %231 = vst [vmem:[#allocation2 + $0x14] sm:$0x3] 0.0
          %232 = vst [vmem:[#allocation2 + $0x16] sm:$0x3] 0.0
          %233 = vst [vmem:[#allocation2 + $0x18] sm:$0x3] 0.0
          %234 = vst [vmem:[#allocation2 + $0x1a] sm:$0x3] 0.0
          %235 = vst [vmem:[#allocation2 + $0x1c] sm:$0x3] 0.0
          %236 = vst [vmem:[#allocation2 + $0x1e] sm:$0x3] 0.0
        $region40: #{tpu_custom_call.1} parent=27 // pred_fallthru
          _
        %v237 = vld [vmem:[%s182] sm:$0x3]
        %v238 = vld [vmem:[%s182 + $0x2] sm:$0x3]
        %v239 = vld [vmem:[%s182 + $0x4] sm:$0x3]
        %v240 = vld [vmem:[%s182 + $0x6] sm:$0x3]
        %v241 = vld [vmem:[%s191] sm:$0x3]
        %vm242 = vcmp.eq.s32.totalorder %v241, 0
        %vm243 = vcmp.eq.s32.totalorder %v241, 1
        %vm244 = vcmp.eq.s32.totalorder %v241, 2
        %vm245 = vcmp.eq.s32.totalorder %v241, 3
        %v246 = vmul.f32 %v237, 1.442695
        %v247 = vpow.pop %v246
        %v248 = vmul.f32 %v238, 1.442695
        %v249 = vpow.pop %v248
        %v250 = vmul.f32 %v239, 1.442695
        %v251 = vpow.pop %v250
        %v252 = vmul.f32 %v240, 1.442695
        %v253 = vpow.pop %v252
        %v254 = vmul.f32 %v247, %v247
        %v255 = vmul.f32 %v249, %v249
        %v256 = vmul.f32 %v251, %v251
        %v257 = vmul.f32 %v253, %v253
        %v258 = vsel %vm242, %v237, 0.0
        %v259 = vsel %vm243, %v238, 0.0
        %v260 = vsel %vm244, %v239, 0.0
        %v261 = vsel %vm245, %v240, 0.0
        %v262 = vsel %vm242, %v247, 0.0
        %v263 = vsel %vm243, %v249, 0.0
        %v264 = vsel %vm244, %v251, 0.0
        %v265 = vsel %vm245, %v253, 0.0
        %v266 = vsel %vm242, 1, 0
        %v267 = vsel %vm243, 1, 0
        %v268 = vsel %vm244, 1, 0
        %v269 = vsel %vm245, 1, 0
        %v270 = vcvt.s32.f32 %v266
        %v271 = vcvt.s32.f32 %v267
        %v272 = vcvt.s32.f32 %v268
        %v273 = vcvt.s32.f32 %v269
        %v274 = vld [vmem:[#allocation2] sm:$0x3]
        %v275 = vld [vmem:[#allocation2 + $0x2] sm:$0x3]
        %v276 = vld [vmem:[#allocation2 + $0x4] sm:$0x3]
        %v277 = vld [vmem:[#allocation2 + $0x6] sm:$0x3]
        %v278 = vadd.f32 %v258, 0.0
        %v279 = vadd.f32 %v259, 0.0
        %v280 = vadd.f32 %v260, 0.0
        %v281 = vadd.f32 %v261, 0.0
        %v282 = vadd.f32 %v274, %v278
        %v283 = vadd.f32 %v275, %v279
        %v284 = vadd.f32 %v276, %v280
        %v285 = vadd.f32 %v277, %v281
        %286 = vst [vmem:[#allocation2] sm:$0x3] %v282
        %287 = vst [vmem:[#allocation2 + $0x2] sm:$0x3] %v283
        %288 = vst [vmem:[#allocation2 + $0x4] sm:$0x3] %v284
        %289 = vst [vmem:[#allocation2 + $0x6] sm:$0x3] %v285
        %s290 = scalar_lea.vmem [#allocation2], 8
        %v291 = vld [vmem:[%s290] sm:$0x3]
        %v292 = vld [vmem:[%s290 + $0x2] sm:$0x3]
        %v293 = vld [vmem:[%s290 + $0x4] sm:$0x3]
        %v294 = vld [vmem:[%s290 + $0x6] sm:$0x3]
        %v295 = vadd.f32 %v262, 0.0
        %v296 = vadd.f32 %v263, 0.0
        %v297 = vadd.f32 %v264, 0.0
        %v298 = vadd.f32 %v265, 0.0
        %v299 = vadd.f32 %v291, %v295
        %v300 = vadd.f32 %v292, %v296
        %v301 = vadd.f32 %v293, %v297
        %v302 = vadd.f32 %v294, %v298
        %303 = vst [vmem:[%s290] sm:$0x3] %v299
        %304 = vst [vmem:[%s290 + $0x2] sm:$0x3] %v300
        %305 = vst [vmem:[%s290 + $0x4] sm:$0x3] %v301
        %306 = vst [vmem:[%s290 + $0x6] sm:$0x3] %v302
        %s307 = scalar_lea.vmem [#allocation2], 16
        %v308 = vld [vmem:[%s307] sm:$0x3]
        %v309 = vld [vmem:[%s307 + $0x2] sm:$0x3]
        %v310 = vld [vmem:[%s307 + $0x4] sm:$0x3]
        %v311 = vld [vmem:[%s307 + $0x6] sm:$0x3]
        %v312 = vadd.f32 %v254, 0.0
        %v313 = vadd.f32 %v255, 0.0
        %v314 = vadd.f32 %v256, 0.0
        %v315 = vadd.f32 %v257, 0.0
        %v316 = vadd.f32 %v308, %v312
        %v317 = vadd.f32 %v309, %v313
        %v318 = vadd.f32 %v310, %v314
        %v319 = vadd.f32 %v311, %v315
        %320 = vst [vmem:[%s307] sm:$0x3] %v316
        %321 = vst [vmem:[%s307 + $0x2] sm:$0x3] %v317
        %322 = vst [vmem:[%s307 + $0x4] sm:$0x3] %v318
        %323 = vst [vmem:[%s307 + $0x6] sm:$0x3] %v319
        %s324 = scalar_lea.vmem [#allocation2], 24
        %v325 = vld [vmem:[%s324] sm:$0x3]
        %v326 = vld [vmem:[%s324 + $0x2] sm:$0x3]
        %v327 = vld [vmem:[%s324 + $0x4] sm:$0x3]
        %v328 = vld [vmem:[%s324 + $0x6] sm:$0x3]
        %v329 = vadd.f32 %v270, 0.0
        %v330 = vadd.f32 %v271, 0.0
        %v331 = vadd.f32 %v272, 0.0
        %v332 = vadd.f32 %v273, 0.0
        %v333 = vadd.f32 %v325, %v329
        %v334 = vadd.f32 %v326, %v330
        %v335 = vadd.f32 %v327, %v331
        %v336 = vadd.f32 %v328, %v332
        %337 = vst [vmem:[%s324] sm:$0x3] %v333
        %338 = vst [vmem:[%s324 + $0x2] sm:$0x3] %v334
        %339 = vst [vmem:[%s324 + $0x4] sm:$0x3] %v335
        %340 = vst [vmem:[%s324 + $0x6] sm:$0x3] %v336
        // Predicated region
        $region41: #{tpu_custom_call.1} parent=27 // pred_check
          %p341 = pneg %p217
        $region42: #{tpu_custom_call.1} parent=27 // pred_check_branch
          %343 = sbr.rel (%p341) target = $region44
        $region43: #{tpu_custom_call.1} parent=27 // pred_region
          %v344 = vld [vmem:[#allocation2] sm:$0x3]
          %v345 = vld [vmem:[#allocation2 + $0x2] sm:$0x3]
          %v346 = vld [vmem:[#allocation2 + $0x4] sm:$0x3]
          %v347 = vld [vmem:[#allocation2 + $0x6] sm:$0x3]
          %v348 = vld [vmem:[#allocation2 + $0x8] sm:$0x3]
          %v349 = vld [vmem:[#allocation2 + $0xa] sm:$0x3]
          %v350 = vld [vmem:[#allocation2 + $0xc] sm:$0x3]
          %v351 = vld [vmem:[#allocation2 + $0xe] sm:$0x3]
          %v352 = vld [vmem:[#allocation2 + $0x10] sm:$0x3]
          %v353 = vld [vmem:[#allocation2 + $0x12] sm:$0x3]
          %v354 = vld [vmem:[#allocation2 + $0x14] sm:$0x3]
          %v355 = vld [vmem:[#allocation2 + $0x16] sm:$0x3]
          %v356 = vld [vmem:[#allocation2 + $0x18] sm:$0x3]
          %v357 = vld [vmem:[#allocation2 + $0x1a] sm:$0x3]
          %v358 = vld [vmem:[#allocation2 + $0x1c] sm:$0x3]
          %v359 = vld [vmem:[#allocation2 + $0x1e] sm:$0x3]
          %vm360 = vcmask 1041408
          %v361 = vsel %vm360, %v344, 0.0
          %v362 = vrot.slane %v361, 4
          %v363 = vadd.f32 %v361, %v362
          %v364 = vrot.slane %v363, 2
          %v365 = vadd.f32 %v363, %v364
          %v366 = vrot.slane %v365, 1
          %v367 = vadd.f32 %v365, %v366
          %v368 = vsel %vm360, %v345, 0.0
          %v369 = vrot.slane %v368, 4
          %v370 = vadd.f32 %v368, %v369
          %v371 = vrot.slane %v370, 2
          %v372 = vadd.f32 %v370, %v371
          %v373 = vrot.slane %v372, 1
          %v374 = vadd.f32 %v372, %v373
          %v375 = vsel %vm360, %v346, 0.0
          %v376 = vrot.slane %v375, 4
          %v377 = vadd.f32 %v375, %v376
          %v378 = vrot.slane %v377, 2
          %v379 = vadd.f32 %v377, %v378
          %v380 = vrot.slane %v379, 1
          %v381 = vadd.f32 %v379, %v380
          %v382 = vsel %vm360, %v347, 0.0
          %v383 = vrot.slane %v382, 4
          %v384 = vadd.f32 %v382, %v383
          %v385 = vrot.slane %v384, 2
          %v386 = vadd.f32 %v384, %v385
          %v387 = vrot.slane %v386, 1
          %v388 = vadd.f32 %v386, %v387
          %v389 = vsel %vm360, %v348, 0.0
          %v390 = vrot.slane %v389, 4
          %v391 = vadd.f32 %v389, %v390
          %v392 = vrot.slane %v391, 2
          %v393 = vadd.f32 %v391, %v392
          %v394 = vrot.slane %v393, 1
          %v395 = vadd.f32 %v393, %v394
          %v396 = vsel %vm360, %v349, 0.0
          %v397 = vrot.slane %v396, 4
          %v398 = vadd.f32 %v396, %v397
          %v399 = vrot.slane %v398, 2
          %v400 = vadd.f32 %v398, %v399
          %v401 = vrot.slane %v400, 1
          %v402 = vadd.f32 %v400, %v401
          %v403 = vsel %vm360, %v350, 0.0
          %v404 = vrot.slane %v403, 4
          %v405 = vadd.f32 %v403, %v404
          %v406 = vrot.slane %v405, 2
          %v407 = vadd.f32 %v405, %v406
          %v408 = vrot.slane %v407, 1
          %v409 = vadd.f32 %v407, %v408
          %v410 = vsel %vm360, %v351, 0.0
          %v411 = vrot.slane %v410, 4
          %v412 = vadd.f32 %v410, %v411
          %v413 = vrot.slane %v412, 2
          %v414 = vadd.f32 %v412, %v413
          %v415 = vrot.slane %v414, 1
          %v416 = vadd.f32 %v414, %v415
          %v417 = vsel %vm360, %v352, 0.0
          %v418 = vrot.slane %v417, 4
          %v419 = vadd.f32 %v417, %v418
          %v420 = vrot.slane %v419, 2
          %v421 = vadd.f32 %v419, %v420
          %v422 = vrot.slane %v421, 1
          %v423 = vadd.f32 %v421, %v422
          %v424 = vsel %vm360, %v353, 0.0
          %v425 = vrot.slane %v424, 4
          %v426 = vadd.f32 %v424, %v425
          %v427 = vrot.slane %v426, 2
          %v428 = vadd.f32 %v426, %v427
          %v429 = vrot.slane %v428, 1
          %v430 = vadd.f32 %v428, %v429
          %v431 = vsel %vm360, %v354, 0.0
          %v432 = vrot.slane %v431, 4
          %v433 = vadd.f32 %v431, %v432
          %v434 = vrot.slane %v433, 2
          %v435 = vadd.f32 %v433, %v434
          %v436 = vrot.slane %v435, 1
          %v437 = vadd.f32 %v435, %v436
          %v438 = vsel %vm360, %v355, 0.0
          %v439 = vrot.slane %v438, 4
          %v440 = vadd.f32 %v438, %v439
          %v441 = vrot.slane %v440, 2
          %v442 = vadd.f32 %v440, %v441
          %v443 = vrot.slane %v442, 1
          %v444 = vadd.f32 %v442, %v443
          %v445 = vsel %vm360, %v356, 0.0
          %v446 = vrot.slane %v445, 4
          %v447 = vadd.f32 %v445, %v446
          %v448 = vrot.slane %v447, 2
          %v449 = vadd.f32 %v447, %v448
          %v450 = vrot.slane %v449, 1
          %v451 = vadd.f32 %v449, %v450
          %v452 = vsel %vm360, %v357, 0.0
          %v453 = vrot.slane %v452, 4
          %v454 = vadd.f32 %v452, %v453
          %v455 = vrot.slane %v454, 2
          %v456 = vadd.f32 %v454, %v455
          %v457 = vrot.slane %v456, 1
          %v458 = vadd.f32 %v456, %v457
          %v459 = vsel %vm360, %v358, 0.0
          %v460 = vrot.slane %v459, 4
          %v461 = vadd.f32 %v459, %v460
          %v462 = vrot.slane %v461, 2
          %v463 = vadd.f32 %v461, %v462
          %v464 = vrot.slane %v463, 1
          %v465 = vadd.f32 %v463, %v464
          %v466 = vsel %vm360, %v359, 0.0
          %v467 = vrot.slane %v466, 4
          %v468 = vadd.f32 %v466, %v467
          %v469 = vrot.slane %v468, 2
          %v470 = vadd.f32 %v468, %v469
          %v471 = vrot.slane %v470, 1
          %v472 = vadd.f32 %v470, %v471
          %vm489 = vcmask 1041409
          %v490 = vsel %vm489, %v374, %v367
          %vm491 = vcmask 1042434
          %v492 = vsel %vm491, %v381, %v490
          %vm493 = vcmask 1043459
          %v494 = vsel %vm493, %v388, %v492
          %v495 = vsel %vm489, %v402, %v395
          %v496 = vsel %vm491, %v409, %v495
          %v497 = vsel %vm493, %v416, %v496
          %v498 = vsel %vm489, %v430, %v423
          %v499 = vsel %vm491, %v437, %v498
          %v500 = vsel %vm493, %v444, %v499
          %v501 = vsel %vm489, %v458, %v451
          %v502 = vsel %vm491, %v465, %v501
          %v503 = vsel %vm493, %v472, %v502
          %508 = vst [vmem:[%s216] sm:$0xf] %v494
          %509 = vst [vmem:[%s216 + $0x4] sm:$0xf] %v497
          %510 = vst [vmem:[%s216 + $0x8] sm:$0xf] %v500
          %511 = vst [vmem:[%s216 + $0xc] sm:$0xf] %v503
        $region44: #{tpu_custom_call.1} parent=27 // pred_fallthru
          _
        %s512 = sand.u32 %s98, 1
        %s513 = scalar_lea.sflag [#allocation5], %s512
        %s514 = sand.u32 %s98, 1
        %s515 = smul.addr %s514, 16
        %s516 = scalar_lea.vmem [#allocation8], %s515
        // Predicated region
        $region45: #{tpu_custom_call.1} parent=27 // pred_check
          %p517 = pneg %p108
        $region46: #{tpu_custom_call.1} parent=27 // pred_check_branch
          %519 = sbr.rel (%p517) target = $region48
        $region47: #{tpu_custom_call.1} parent=27 // pred_region
          %s521 = ssub.s32 256, 256
          %522 = vsyncadd %s513, %s521
          %s523 = smul.addr %s26, 4
          %s524 = smul.addr %s523, 64
          %s525 = scalar_lea.hbm %s2, %s524
          %s526 = sshll.u32 %s516, 4
          %s527 = int_to_ptr.vmem [resolvable:$true] %s526
          %532 = dma.vmem_to_hbm [thread:$0]  %s527, 256, %s525, %s513, 64, 64, 4
        $region48: #{tpu_custom_call.1} parent=27 // pred_fallthru
          _
      $region28: #{tpu_custom_call.1} parent=5 // pred_fallthru
        _
      %p533 = scmp.le.s32.totalorder 2, %s17
      // Predicated region
      $region49: #{tpu_custom_call.1} parent=5 // pred_check
        %p534 = pneg %p533
      $region50: #{tpu_custom_call.1} parent=5 // pred_check_branch
        %536 = sbr.rel (%p534) target = $region52
      $region51: #{tpu_custom_call.1} parent=5 // pred_region
        %s537 = ssub.s32 %s17, 2
        // Predicated region
        $region53: #{tpu_custom_call.1} parent=51 // pred_check
          %p538 = pneg %p114
        $region54: #{tpu_custom_call.1} parent=51 // pred_check_branch
          %540 = sbr.rel (%p538) target = $region56
        $region55: #{tpu_custom_call.1} parent=51 // pred_region
          %s541 = sand.u32 %s99, 1
          %s542 = scalar_lea.sflag [#allocation5], %s541
          %s543 = sand.u32 %s99, 1
          %s544 = smul.addr %s543, 16
          %s545 = scalar_lea.vmem [#allocation8], %s544
          %546 = dma.done %s542, 256
        $region56: #{tpu_custom_call.1} parent=51 // pred_fallthru
          _
      $region52: #{tpu_custom_call.1} parent=5 // pred_fallthru
        _
    $region6: #{tpu_custom_call.1} parent=1 // loop_footer
      %s21 = sadd.s32 1, %s17
    $region7: #{tpu_custom_call.1} parent=1 // loop_footer_branch
      %16 = sbr.rel target = $region3
    $region8: #{tpu_custom_call.1} parent=1 // loop_exit
      _
    %547 = vsyncpa [#allocation4], 1
    %s548 = scalar_lea.sflag [#allocation4], 1
    %549 = vsyncpa %s548, 1
    %550 = vsyncpa [#allocation7], 1
    %s551 = scalar_lea.sflag [#allocation7], 1
    %552 = vsyncpa %s551, 1
    %553 = vsyncpa [#allocation5], 1
    %s554 = scalar_lea.sflag [#allocation5], 1
    %555 = vsyncpa %s554, 1

</llo_original>
